<compile_context>
chip_gen: v6e
topology: v6e:2x2x1
jax: 0.10.0
libtpu: 0.0.40
codegen_flags: <defaults>
</compile_context>

<pallas_src>
import jax
import jax.numpy as jnp
from jax.experimental import pallas as pl
from jax.experimental.pallas import tpu as pltpu


def adaptor_kernel(x_ref, w_ref, b_ref, o_ref):
    # Read the input tile once; keep the hidden state in registers.
    h = x_ref[...].astype(jnp.float32)          # (bt, D)
    num_layers = w_ref.shape[0]                 # static
    for l in range(num_layers):                 # small, static L -> unrolled
        w = w_ref[l]                            # (D, D)
        b = b_ref[l]                            # (1, D)
        y = jnp.dot(h, w, preferred_element_type=jnp.float32) + b
        h = jnp.maximum(y, 0.0)
    o_ref[...] = h.astype(o_ref.dtype)          # single store at the end


def adaptor_forward(his_emb, weights, biases, *, batch_tile=None):
    """his_emb: (B, D) f32, weights: (L, D, D) f32, biases: (L, 1, D) f32.

    Computes h <- relu(h @ W_l + b_l) for l = 0..L-1 in one pallas_call.
    Weights are stored as the transpose of PyTorch's (out, in) layout.
    """
    B, D = his_emb.shape
    L = weights.shape[0]

    # Batch-tile grid axis: lets large batches fill MXU rows / split across
    # TensorCores ("parallel").  For small B it is a single grid step.
    if batch_tile is None:
        batch_tile = B if B <= 128 else 128
    assert B % batch_tile == 0, "batch must be divisible by batch_tile"
    n_bt = B // batch_tile

    cost = pl.CostEstimate(
        flops=2 * L * B * D * D,
        transcendentals=0,
        bytes_accessed=(L * D * D + L * D + 2 * B * D) * 4,
    )

    return pl.pallas_call(
        adaptor_kernel,
        out_shape=jax.ShapeDtypeStruct((B, D), his_emb.dtype),
        grid_spec=pltpu.PrefetchScalarGridSpec(
            num_scalar_prefetch=0,
            grid=(n_bt,),
            in_specs=[
                pl.BlockSpec((batch_tile, D), lambda i: (i, 0)),  # input tile
                pl.BlockSpec((L, D, D), lambda i: (0, 0, 0)),      # all weights
                pl.BlockSpec((L, 1, D), lambda i: (0, 0, 0)),      # all biases
            ],
            out_specs=pl.BlockSpec((batch_tile, D), lambda i: (i, 0)),
        ),
        compiler_params=pltpu.CompilerParams(
            dimension_semantics=("parallel",),
        ),
        cost_estimate=cost,
    )(his_emb, weights, biases)


def init_adaptor_params(key, input_size, layers):
    """Deterministic init matching torch.nn.Linear's U(-1/sqrt(fan_in), +) scheme."""
    bound = 1.0 / (input_size ** 0.5)
    ws, bs = [], []
    for _ in range(layers):
        kw, kb, key = jax.random.split(key, 3)
        # PyTorch weight is (out, in); we store the transpose so y = x @ W.
        w = jax.random.uniform(kw, (input_size, input_size),
                               minval=-bound, maxval=bound, dtype=jnp.float32)
        b = jax.random.uniform(kb, (1, input_size),
                               minval=-bound, maxval=bound, dtype=jnp.float32)
        ws.append(w)
        bs.append(b)
    return jnp.stack(ws, axis=0), jnp.stack(bs, axis=0)


def adaptor_reference(his_emb, weights, biases):
    h = his_emb
    for l in range(weights.shape[0]):
        h = jnp.maximum(h @ weights[l] + biases[l], 0.0)
    return h


if __name__ == "__main__":
    B = 8          # batch
    D = 32         # input_size (hidden)
    L = 3          # layers

    key = jax.random.PRNGKey(0)
    kx, kp = jax.random.split(key)
    his_emb = jax.random.normal(kx, (B, D), dtype=jnp.float32)
    weights, biases = init_adaptor_params(kp, D, L)

    out = adaptor_forward(his_emb, weights, biases)
    out = jax.block_until_ready(out)

    ref = adaptor_reference(his_emb, weights, biases)
    assert out.shape == (B, D)
    assert jnp.allclose(out, ref, atol=1e-5, rtol=1e-5), "mismatch vs reference"

    print("KERNEL_OK")
</pallas_src>

<mosaic_0001>
module attributes {stable_mosaic.version = 11 : i64} {
  func.func @adaptor_kernel(%arg0: i32, %arg1: memref<8x32xf32, #tpu.memory_space<vmem>>, %arg2: memref<3x32x32xf32, #tpu.memory_space<vmem>>, %arg3: memref<3x1x32xf32, #tpu.memory_space<vmem>>, %arg4: memref<8x32xf32, #tpu.memory_space<vmem>>) attributes {dimension_semantics = [#tpu.dimension_semantics<parallel>], iteration_bounds = array<i64: 1>, scalar_prefetch = 0 : i64, scratch_operands = 0 : i64, tpu.core_type = #tpu.core_type<tc>, window_params = [{transform_indices = @transform_0, window_bounds = array<i64: 8, 32>}, {pipeline_mode = #tpu.pipeline_mode<synchronous>, transform_indices = @transform_1, window_bounds = array<i64: 3, 32, 32>}, {pipeline_mode = #tpu.pipeline_mode<synchronous>, transform_indices = @transform_2, window_bounds = array<i64: 3, 1, 32>}, {transform_indices = @transform_3, window_bounds = array<i64: 8, 32>}]} {
    %c0 = arith.constant 0 : index
    %c0_0 = arith.constant 0 : index
    %0 = vector.load %arg1[%c0, %c0_0] : memref<8x32xf32, #tpu.memory_space<vmem>>, vector<8x32xf32>
    %c0_1 = arith.constant 0 : index
    %c0_2 = arith.constant 0 : index
    %c0_3 = arith.constant 0 : index
    %1 = vector.load %arg2[%c0_1, %c0_2, %c0_3] : memref<3x32x32xf32, #tpu.memory_space<vmem>>, vector<1x32x32xf32>
    %2 = vector.shape_cast %1 : vector<1x32x32xf32> to vector<32x32xf32>
    %c0_4 = arith.constant 0 : index
    %c0_5 = arith.constant 0 : index
    %c0_6 = arith.constant 0 : index
    %3 = vector.load %arg3[%c0_4, %c0_5, %c0_6] : memref<3x1x32xf32, #tpu.memory_space<vmem>>, vector<1x1x32xf32>
    %4 = vector.shape_cast %3 : vector<1x1x32xf32> to vector<1x32xf32>
    %cst = arith.constant dense<0.000000e+00> : vector<8x32xf32>
    %5 = tpu.matmul %0, %2, %cst {dimension_numbers = #tpu.dot_dimension_numbers<[1], [0], [0], [1], [0, 0, 1, 1], [], []>} : vector<8x32xf32>, vector<32x32xf32>, vector<8x32xf32> -> vector<8x32xf32>
    %6 = vector.broadcast %4 : vector<1x32xf32> to vector<8x32xf32>
    %7 = arith.addf %5, %6 : vector<8x32xf32>
    %cst_7 = arith.constant 0.000000e+00 : f32
    %8 = vector.broadcast %cst_7 : f32 to vector<8x32xf32>
    %9 = arith.maximumf %7, %8 : vector<8x32xf32>
    %c1 = arith.constant 1 : index
    %c0_8 = arith.constant 0 : index
    %c0_9 = arith.constant 0 : index
    %10 = vector.load %arg2[%c1, %c0_8, %c0_9] : memref<3x32x32xf32, #tpu.memory_space<vmem>>, vector<1x32x32xf32>
    %11 = vector.shape_cast %10 : vector<1x32x32xf32> to vector<32x32xf32>
    %c1_10 = arith.constant 1 : index
    %c0_11 = arith.constant 0 : index
    %c0_12 = arith.constant 0 : index
    %12 = vector.load %arg3[%c1_10, %c0_11, %c0_12] : memref<3x1x32xf32, #tpu.memory_space<vmem>>, vector<1x1x32xf32>
    %13 = vector.shape_cast %12 : vector<1x1x32xf32> to vector<1x32xf32>
    %cst_13 = arith.constant dense<0.000000e+00> : vector<8x32xf32>
    %14 = tpu.matmul %9, %11, %cst_13 {dimension_numbers = #tpu.dot_dimension_numbers<[1], [0], [0], [1], [0, 0, 1, 1], [], []>} : vector<8x32xf32>, vector<32x32xf32>, vector<8x32xf32> -> vector<8x32xf32>
    %15 = vector.broadcast %13 : vector<1x32xf32> to vector<8x32xf32>
    %16 = arith.addf %14, %15 : vector<8x32xf32>
    %cst_14 = arith.constant 0.000000e+00 : f32
    %17 = vector.broadcast %cst_14 : f32 to vector<8x32xf32>
    %18 = arith.maximumf %16, %17 : vector<8x32xf32>
    %c2 = arith.constant 2 : index
    %c0_15 = arith.constant 0 : index
    %c0_16 = arith.constant 0 : index
    %19 = vector.load %arg2[%c2, %c0_15, %c0_16] : memref<3x32x32xf32, #tpu.memory_space<vmem>>, vector<1x32x32xf32>
    %20 = vector.shape_cast %19 : vector<1x32x32xf32> to vector<32x32xf32>
    %c2_17 = arith.constant 2 : index
    %c0_18 = arith.constant 0 : index
    %c0_19 = arith.constant 0 : index
    %21 = vector.load %arg3[%c2_17, %c0_18, %c0_19] : memref<3x1x32xf32, #tpu.memory_space<vmem>>, vector<1x1x32xf32>
    %22 = vector.shape_cast %21 : vector<1x1x32xf32> to vector<1x32xf32>
    %cst_20 = arith.constant dense<0.000000e+00> : vector<8x32xf32>
    %23 = tpu.matmul %18, %20, %cst_20 {dimension_numbers = #tpu.dot_dimension_numbers<[1], [0], [0], [1], [0, 0, 1, 1], [], []>} : vector<8x32xf32>, vector<32x32xf32>, vector<8x32xf32> -> vector<8x32xf32>
    %24 = vector.broadcast %22 : vector<1x32xf32> to vector<8x32xf32>
    %25 = arith.addf %23, %24 : vector<8x32xf32>
    %cst_21 = arith.constant 0.000000e+00 : f32
    %26 = vector.broadcast %cst_21 : f32 to vector<8x32xf32>
    %27 = arith.maximumf %25, %26 : vector<8x32xf32>
    %c0_22 = arith.constant 0 : index
    %c0_23 = arith.constant 0 : index
    %28 = vector.load %arg4[%c0_22, %c0_23] : memref<8x32xf32, #tpu.memory_space<vmem>>, vector<8x32xf32>
    tpu.vector_store %arg4[%c0_22, %c0_23], %27 {strides = array<i32>} : memref<8x32xf32, #tpu.memory_space<vmem>>, vector<8x32xf32>,
    return
  }
  func.func @transform_0(%arg0: i32) -> (i32, i32) {
    %c0_i32 = arith.constant 0 : i32
    %c0_i32_0 = arith.constant 0 : i32
    return %arg0, %c0_i32 : i32, i32
  }
  func.func @transform_1(%arg0: i32) -> (i32, i32, i32) {
    %c0_i32 = arith.constant 0 : i32
    %c0_i32_0 = arith.constant 0 : i32
    %c0_i32_1 = arith.constant 0 : i32
    %c0_i32_2 = arith.constant 0 : i32
    return %c0_i32, %c0_i32_0, %c0_i32_1 : i32, i32, i32
  }
  func.func @transform_2(%arg0: i32) -> (i32, i32, i32) {
    %c0_i32 = arith.constant 0 : i32
    %c0_i32_0 = arith.constant 0 : i32
    %c0_i32_1 = arith.constant 0 : i32
    %c0_i32_2 = arith.constant 0 : i32
    return %c0_i32, %c0_i32_0, %c0_i32_1 : i32, i32, i32
  }
  func.func @transform_3(%arg0: i32) -> (i32, i32) {
    %c0_i32 = arith.constant 0 : i32
    %c0_i32_0 = arith.constant 0 : i32
    return %arg0, %c0_i32 : i32, i32
  }
}

</mosaic_0001>

<llo_original>
// kernel: tpu_custom_call.1
$region0: #{tpu_custom_call.1}
  #allocation0 [shape = 'u32[]', space=smem, size = 0x4, offset = 0x4, fixed_abs, tag = 'smem constant byte address 0x4 - core index']
  #allocation1 [shape = 'u32[144,128]{1,0:T(1,128)}', space=vmem, size = 0x12000, scoped, tag = 'internal scratch']
  %s0 = inlined_call_operand.hbm [shape: f32[8,32], index: 0, kind: input, shape index: {}]
  %s1 = inlined_call_operand.hbm [shape: f32[3,32,32], index: 1, kind: input, shape index: {}]
  %s2 = inlined_call_operand.vmem [shape: f32[3,1,32], index: 2, kind: input, shape index: {}]
  %s3 = inlined_call_operand.hbm [shape: f32[8,32], index: 3, kind: output, shape index: {}]
  %s4 = sld [smem:[#allocation0]]
  $region30: #{tpu_custom_call.1} parent=0
    _
  %s6 = ssub.s32 1, %s4
  %s7 = scalar_select 0, %s6, %s4
  $region1: #{tpu_custom_call.1} parent=0
    #allocation2 [shape = 'u8[4096]{0}', space=vmem, size = 0x1000, scoped, tag = 'input window, operand 0, single buffered']
    #allocation3 [shape = 's32[1]{0}', space=sflag, size = 0x4, scoped, tag = 'scoped memory for tpu_custom_call.1']
    #allocation4 [shape = 's32[1]{0}', space=sflag, size = 0x4, scoped, tag = 'scoped memory for tpu_custom_call.1']
    #allocation5 [shape = 'u8[49152]{0}', space=vmem, size = 0xc000, scoped, tag = 'input window, operand 1, single buffered']
    #allocation6 [shape = 's32[1]{0}', space=sflag, size = 0x4, scoped, tag = 'scoped memory for tpu_custom_call.1']
    #allocation7 [shape = 'u8[4096]{0}', space=vmem, size = 0x1000, scoped, tag = 'output window, operand 0, single buffered']
    %8 = vsyncpa [#allocation3], 0
    %9 = vsyncpa [#allocation6], 0
    %10 = vsyncpa [#allocation4], 0
    // Predicated region
    $region2: #{tpu_custom_call.1} parent=1 // pred_check
      _
    $region3: #{tpu_custom_call.1} parent=1 // pred_check_branch
      %12 = sbr.rel (0) target = $region5
    $region4: #{tpu_custom_call.1} parent=1 // pred_region
      %s14 = ssub.s32 128, 128
      %15 = vsyncadd [#allocation3], %s14
      %s17 = sshll.u32 [#allocation2], 4
      %s18 = int_to_ptr.vmem [resolvable:$true] %s17
      %20 = dma.hbm_to_vmem [thread:$0]  %s0, 128, %s18, [#allocation3]
    $region5: #{tpu_custom_call.1} parent=1 // pred_fallthru
      _
    // Predicated region
    $region6: #{tpu_custom_call.1} parent=1 // pred_check
      _
    $region7: #{tpu_custom_call.1} parent=1 // pred_check_branch
      %22 = sbr.rel (0) target = $region9
    $region8: #{tpu_custom_call.1} parent=1 // pred_region
      %s24 = ssub.s32 1536, 1536
      %25 = vsyncadd [#allocation6], %s24
      %s26 = sshll.u32 [#allocation5], 4
      %s27 = int_to_ptr.vmem [resolvable:$true] %s26
      %32 = dma.hbm_to_vmem [thread:$0]  %s1, 1536, %s27, [#allocation6], 128, 128, 8
    $region9: #{tpu_custom_call.1} parent=1 // pred_fallthru
      _
    // Predicated region
    $region10: #{tpu_custom_call.1} parent=1 // pred_check
      _
    $region11: #{tpu_custom_call.1} parent=1 // pred_check_branch
      %34 = sbr.rel (0) target = $region13
    $region12: #{tpu_custom_call.1} parent=1 // pred_region
      _
    $region13: #{tpu_custom_call.1} parent=1 // pred_fallthru
      _
    // Predicated region
    $region14: #{tpu_custom_call.1} parent=1 // pred_check
      _
    $region15: #{tpu_custom_call.1} parent=1 // pred_check_branch
      %36 = sbr.rel (0) target = $region17
    $region16: #{tpu_custom_call.1} parent=1 // pred_region
      %37 = dma.done [#allocation3], 128
    $region17: #{tpu_custom_call.1} parent=1 // pred_fallthru
      _
    // Predicated region
    $region18: #{tpu_custom_call.1} parent=1 // pred_check
      _
    $region19: #{tpu_custom_call.1} parent=1 // pred_check_branch
      %39 = sbr.rel (0) target = $region21
    $region20: #{tpu_custom_call.1} parent=1 // pred_region
      %40 = dma.done [#allocation6], 1536
    $region21: #{tpu_custom_call.1} parent=1 // pred_fallthru
      _
    %v41 = vld [vmem:[#allocation2] sm:$0xff]
    %v42 = vld [vmem:[#allocation5] sm:$0xff]
    %v43 = vld [vmem:[#allocation5 + $0x8] sm:$0xff]
    %v44 = vld [vmem:[#allocation5 + $0x10] sm:$0xff]
    %v45 = vld [vmem:[#allocation5 + $0x18] sm:$0xff]
    %v46 = vld [vmem:[%s2] sm:$0x1]
    %v48 = vlaneseq
    %v49 = vshrl.u32 %v48, 7
    %v50 = vsub.s32 0, %v49
    %v51 = vrot.slane %v46, %v50
    %vm53 = vcmask 261120
    %v55 = vsel %vm53, %v41, 0
    %57 = vmatprep.subr.mxu0 0.0
    %58 = vmatpush1.msra.mxu0 0.0
    %59 = vmatprep.subr.mxu0 0.0
    %60 = vmatpush1.msra.mxu0 0.0
    %61 = vmatprep.subr.mxu0 0.0
    %62 = vmatpush1.msra.mxu0 0.0
    %63 = vmatprep.subr.mxu0 0.0
    %64 = vmatpush1.msra.mxu0 0.0
    %65 = vmatprep.subr.mxu0 0.0
    %66 = vmatpush1.msra.mxu0 0.0
    %67 = vmatprep.subr.mxu0 0.0
    %68 = vmatpush1.msra.mxu0 0.0
    %69 = vmatprep.subr.mxu0 0.0
    %70 = vmatpush1.msra.mxu0 0.0
    %71 = vmatprep.subr.mxu0 0.0
    %72 = vmatpush1.msra.mxu0 0.0
    %73 = vmatprep.subr.mxu0 0.0
    %74 = vmatpush1.msra.mxu0 0.0
    %75 = vmatprep.subr.mxu0 0.0
    %76 = vmatpush1.msra.mxu0 0.0
    %77 = vmatprep.subr.mxu0 0.0
    %78 = vmatpush1.msra.mxu0 0.0
    %79 = vmatprep.subr.mxu0 0.0
    %80 = vmatpush1.msra.mxu0 0.0
    %81 = vmatprep.subr.mxu0 0.0
    %82 = vmatpush1.msra.mxu0 %v45
    %83 = vmatprep.subr.mxu0 0.0
    %84 = vmatpush1.msra.mxu0 %v44
    %85 = vmatprep.subr.mxu0 0.0
    %86 = vmatpush1.msra.mxu0 %v43
    %87 = vmatprep.subr.mxu0 0.0
    %88 = vmatpush1.msra.mxu0 %v42
    %89 = vmatprep.subr.mxu0 0.0
    %90 = vmatpush2.msra.mxu0 0.0
    %91 = vmatprep.subr.mxu0 0.0
    %92 = vmatpush2.msra.mxu0 0.0
    %93 = vmatprep.subr.mxu0 0.0
    %94 = vmatpush2.msra.mxu0 0.0
    %95 = vmatprep.subr.mxu0 0.0
    %96 = vmatpush2.msra.mxu0 0.0
    %97 = vmatprep.subr.mxu0 0.0
    %98 = vmatpush2.msra.mxu0 0.0
    %99 = vmatprep.subr.mxu0 0.0
    %100 = vmatpush2.msra.mxu0 0.0
    %101 = vmatprep.subr.mxu0 0.0
    %102 = vmatpush2.msra.mxu0 0.0
    %103 = vmatprep.subr.mxu0 0.0
    %104 = vmatpush2.msra.mxu0 0.0
    %105 = vmatprep.subr.mxu0 0.0
    %106 = vmatpush2.msra.mxu0 0.0
    %107 = vmatprep.subr.mxu0 0.0
    %108 = vmatpush2.msra.mxu0 0.0
    %109 = vmatprep.subr.mxu0 0.0
    %110 = vmatpush2.msra.mxu0 0.0
    %111 = vmatprep.subr.mxu0 0.0
    %112 = vmatpush2.msra.mxu0 0.0
    %113 = vmatprep.subr.mxu0 0.0
    %114 = vmatpush2.msra.mxu0 0.0
    %115 = vmatprep.subr.mxu0 0.0
    %116 = vmatpush2.msra.mxu0 0.0
    %117 = vmatprep.subr.mxu0 0.0
    %118 = vmatpush2.msra.mxu0 0.0
    %119 = vmatprep.subr.mxu0 0.0
    %120 = vmatpush2.msra.mxu0 0.0
    %121 = vmatprep.mubr.f32.mxu0 0.0
    %122 = vmatmul.mubr.f32.gmra.mxu0 %v55
    %v123 = vpop.f32.mrf.mxu0
    %v124 = vadd.f32 %v51, %v123
    %v125 = vpop.f32.mrf.mxu0
    %126 = vdwg.mxu0
    %v127 = vmax.f32 %v124, 0.0
    %s128 = scalar_lea.vmem [#allocation5], 32
    %v129 = vld [vmem:[%s128] sm:$0xff]
    %v130 = vld [vmem:[%s128 + $0x8] sm:$0xff]
    %v131 = vld [vmem:[%s128 + $0x10] sm:$0xff]
    %v132 = vld [vmem:[%s128 + $0x18] sm:$0xff]
    %s133 = scalar_lea.vmem %s2, 1
    %v134 = vld [vmem:[%s133] sm:$0x1]
    %v136 = vlaneseq
    %v137 = vshrl.u32 %v136, 7
    %v138 = vsub.s32 0, %v137
    %v139 = vrot.slane %v134, %v138
    %v142 = vsel %vm53, %v127, 0
    %144 = vmatprep.subr.mxu0 0.0
    %145 = vmatpush1.msra.mxu0 0.0
    %146 = vmatprep.subr.mxu0 0.0
    %147 = vmatpush1.msra.mxu0 0.0
    %148 = vmatprep.subr.mxu0 0.0
    %149 = vmatpush1.msra.mxu0 0.0
    %150 = vmatprep.subr.mxu0 0.0
    %151 = vmatpush1.msra.mxu0 0.0
    %152 = vmatprep.subr.mxu0 0.0
    %153 = vmatpush1.msra.mxu0 0.0
    %154 = vmatprep.subr.mxu0 0.0
    %155 = vmatpush1.msra.mxu0 0.0
    %156 = vmatprep.subr.mxu0 0.0
    %157 = vmatpush1.msra.mxu0 0.0
    %158 = vmatprep.subr.mxu0 0.0
    %159 = vmatpush1.msra.mxu0 0.0
    %160 = vmatprep.subr.mxu0 0.0
    %161 = vmatpush1.msra.mxu0 0.0
    %162 = vmatprep.subr.mxu0 0.0
    %163 = vmatpush1.msra.mxu0 0.0
    %164 = vmatprep.subr.mxu0 0.0
    %165 = vmatpush1.msra.mxu0 0.0
    %166 = vmatprep.subr.mxu0 0.0
    %167 = vmatpush1.msra.mxu0 0.0
    %168 = vmatprep.subr.mxu0 0.0
    %169 = vmatpush1.msra.mxu0 %v132
    %170 = vmatprep.subr.mxu0 0.0
    %171 = vmatpush1.msra.mxu0 %v131
    %172 = vmatprep.subr.mxu0 0.0
    %173 = vmatpush1.msra.mxu0 %v130
    %174 = vmatprep.subr.mxu0 0.0
    %175 = vmatpush1.msra.mxu0 %v129
    %176 = vmatprep.subr.mxu0 0.0
    %177 = vmatpush2.msra.mxu0 0.0
    %178 = vmatprep.subr.mxu0 0.0
    %179 = vmatpush2.msra.mxu0 0.0
    %180 = vmatprep.subr.mxu0 0.0
    %181 = vmatpush2.msra.mxu0 0.0
    %182 = vmatprep.subr.mxu0 0.0
    %183 = vmatpush2.msra.mxu0 0.0
    %184 = vmatprep.subr.mxu0 0.0
    %185 = vmatpush2.msra.mxu0 0.0
    %186 = vmatprep.subr.mxu0 0.0
    %187 = vmatpush2.msra.mxu0 0.0
    %188 = vmatprep.subr.mxu0 0.0
    %189 = vmatpush2.msra.mxu0 0.0
    %190 = vmatprep.subr.mxu0 0.0
    %191 = vmatpush2.msra.mxu0 0.0
    %192 = vmatprep.subr.mxu0 0.0
    %193 = vmatpush2.msra.mxu0 0.0
    %194 = vmatprep.subr.mxu0 0.0
    %195 = vmatpush2.msra.mxu0 0.0
    %196 = vmatprep.subr.mxu0 0.0
    %197 = vmatpush2.msra.mxu0 0.0
    %198 = vmatprep.subr.mxu0 0.0
    %199 = vmatpush2.msra.mxu0 0.0
    %200 = vmatprep.subr.mxu0 0.0
    %201 = vmatpush2.msra.mxu0 0.0
    %202 = vmatprep.subr.mxu0 0.0
    %203 = vmatpush2.msra.mxu0 0.0
    %204 = vmatprep.subr.mxu0 0.0
    %205 = vmatpush2.msra.mxu0 0.0
    %206 = vmatprep.subr.mxu0 0.0
    %207 = vmatpush2.msra.mxu0 0.0
    %208 = vmatprep.mubr.f32.mxu0 0.0
    %209 = vmatmul.mubr.f32.gmra.mxu0 %v142
    %v210 = vpop.f32.mrf.mxu0
    %v211 = vadd.f32 %v139, %v210
    %v212 = vpop.f32.mrf.mxu0
    %213 = vdwg.mxu0
    %v214 = vmax.f32 %v211, 0.0
    %s215 = scalar_lea.vmem [#allocation5], 64
    %v216 = vld [vmem:[%s215] sm:$0xff]
    %v217 = vld [vmem:[%s215 + $0x8] sm:$0xff]
    %v218 = vld [vmem:[%s215 + $0x10] sm:$0xff]
    %v219 = vld [vmem:[%s215 + $0x18] sm:$0xff]
    %s220 = scalar_lea.vmem %s2, 2
    %v221 = vld [vmem:[%s220] sm:$0x1]
    %v223 = vlaneseq
    %v224 = vshrl.u32 %v223, 7
    %v225 = vsub.s32 0, %v224
    %v226 = vrot.slane %v221, %v225
    %v229 = vsel %vm53, %v214, 0
    %231 = vmatprep.subr.mxu0 0.0
    %232 = vmatpush1.msra.mxu0 0.0
    %233 = vmatprep.subr.mxu0 0.0
    %234 = vmatpush1.msra.mxu0 0.0
    %235 = vmatprep.subr.mxu0 0.0
    %236 = vmatpush1.msra.mxu0 0.0
    %237 = vmatprep.subr.mxu0 0.0
    %238 = vmatpush1.msra.mxu0 0.0
    %239 = vmatprep.subr.mxu0 0.0
    %240 = vmatpush1.msra.mxu0 0.0
    %241 = vmatprep.subr.mxu0 0.0
    %242 = vmatpush1.msra.mxu0 0.0
    %243 = vmatprep.subr.mxu0 0.0
    %244 = vmatpush1.msra.mxu0 0.0
    %245 = vmatprep.subr.mxu0 0.0
    %246 = vmatpush1.msra.mxu0 0.0
    %247 = vmatprep.subr.mxu0 0.0
    %248 = vmatpush1.msra.mxu0 0.0
    %249 = vmatprep.subr.mxu0 0.0
    %250 = vmatpush1.msra.mxu0 0.0
    %251 = vmatprep.subr.mxu0 0.0
    %252 = vmatpush1.msra.mxu0 0.0
    %253 = vmatprep.subr.mxu0 0.0
    %254 = vmatpush1.msra.mxu0 0.0
    %255 = vmatprep.subr.mxu0 0.0
    %256 = vmatpush1.msra.mxu0 %v219
    %257 = vmatprep.subr.mxu0 0.0
    %258 = vmatpush1.msra.mxu0 %v218
    %259 = vmatprep.subr.mxu0 0.0
    %260 = vmatpush1.msra.mxu0 %v217
    %261 = vmatprep.subr.mxu0 0.0
    %262 = vmatpush1.msra.mxu0 %v216
    %263 = vmatprep.subr.mxu0 0.0
    %264 = vmatpush2.msra.mxu0 0.0
    %265 = vmatprep.subr.mxu0 0.0
    %266 = vmatpush2.msra.mxu0 0.0
    %267 = vmatprep.subr.mxu0 0.0
    %268 = vmatpush2.msra.mxu0 0.0
    %269 = vmatprep.subr.mxu0 0.0
    %270 = vmatpush2.msra.mxu0 0.0
    %271 = vmatprep.subr.mxu0 0.0
    %272 = vmatpush2.msra.mxu0 0.0
    %273 = vmatprep.subr.mxu0 0.0
    %274 = vmatpush2.msra.mxu0 0.0
    %275 = vmatprep.subr.mxu0 0.0
    %276 = vmatpush2.msra.mxu0 0.0
    %277 = vmatprep.subr.mxu0 0.0
    %278 = vmatpush2.msra.mxu0 0.0
    %279 = vmatprep.subr.mxu0 0.0
    %280 = vmatpush2.msra.mxu0 0.0
    %281 = vmatprep.subr.mxu0 0.0
    %282 = vmatpush2.msra.mxu0 0.0
    %283 = vmatprep.subr.mxu0 0.0
    %284 = vmatpush2.msra.mxu0 0.0
    %285 = vmatprep.subr.mxu0 0.0
    %286 = vmatpush2.msra.mxu0 0.0
    %287 = vmatprep.subr.mxu0 0.0
    %288 = vmatpush2.msra.mxu0 0.0
    %289 = vmatprep.subr.mxu0 0.0
    %290 = vmatpush2.msra.mxu0 0.0
    %291 = vmatprep.subr.mxu0 0.0
    %292 = vmatpush2.msra.mxu0 0.0
    %293 = vmatprep.subr.mxu0 0.0
    %294 = vmatpush2.msra.mxu0 0.0
    %295 = vmatprep.mubr.f32.mxu0 0.0
    %296 = vmatmul.mubr.f32.gmra.mxu0 %v229
    %v297 = vpop.f32.mrf.mxu0
    %v298 = vadd.f32 %v226, %v297
    %v299 = vpop.f32.mrf.mxu0
    %300 = vdwg.mxu0
    %v301 = vmax.f32 %v298, 0.0
    %302 = vst.msk [vmem:[#allocation7] sm:$0xff] %vm53, %v301
    // Predicated region
    $region22: #{tpu_custom_call.1} parent=1 // pred_check
      _
    $region23: #{tpu_custom_call.1} parent=1 // pred_check_branch
      %304 = sbr.rel (0) target = $region25
    $region24: #{tpu_custom_call.1} parent=1 // pred_region
      %s306 = ssub.s32 128, 128
      %307 = vsyncadd [#allocation4], %s306
      %s309 = sshll.u32 [#allocation7], 4
      %s310 = int_to_ptr.vmem [resolvable:$true] %s309
      %312 = dma.vmem_to_hbm [thread:$0]  %s310, 128, %s3, [#allocation4]
    $region25: #{tpu_custom_call.1} parent=1 // pred_fallthru
      _
    // Predicated region
    $region26: #{tpu_custom_call.1} parent=1 // pred_check
      _
    $region27: #{tpu_custom_call.1} parent=1 // pred_check_branch
      %314 = sbr.rel (0) target = $region29
    $region28: #{tpu_custom_call.1} parent=1 // pred_region
      %315 = dma.done [#allocation4], 128
    $region29: #{tpu_custom_call.1} parent=1 // pred_fallthru
      _
    %316 = vsyncpa [#allocation3], 1
    %317 = vsyncpa [#allocation6], 1
    %318 = vsyncpa [#allocation4], 1

</llo_original>
